<compile_context>
chip_gen: v7x
topology: tpu7x:2x2x1
jax: 0.10.0
libtpu: 0.0.40
codegen_flags: <defaults>
</compile_context>

<pallas_src>
import functools

import jax
import jax.numpy as jnp
from jax.experimental import pallas as pl
from jax.experimental.pallas import tpu as pltpu

_LANES = 128
_PARTIAL_ROWS = 8  # sublane-aligned rows for the per-core partial-sum block


def _cdiv(a, b):
    return -(-a // b)


# --------------------------------------------------------------------------
# Trace-time hardware queries (cached; fall back to safe defaults).
# --------------------------------------------------------------------------
@functools.lru_cache(maxsize=1)
def _device_kind():
    try:
        return jax.devices()[0].device_kind.lower()
    except Exception:
        return ""


@functools.lru_cache(maxsize=1)
def _vmem_capacity_bytes():
    try:
        return int(pltpu.get_tpu_info().vmem_capacity_bytes)
    except Exception:
        pass
    kind = _device_kind()
    if "v7" in kind or "7x" in kind:
        return 64 << 20
    return 128 << 20


@functools.lru_cache(maxsize=1)
def _num_tensorcores():
    kind = _device_kind()
    return 2 if ("v7" in kind or "7x" in kind) else 1


@functools.lru_cache(maxsize=1)
def _supports_bf16_eup():
    kind = _device_kind()
    return ("v6" in kind) or ("v7" in kind) or ("7x" in kind)


# --------------------------------------------------------------------------
# Shared accumulation / masking / finalization logic.
# --------------------------------------------------------------------------
def _accum_and_finalize(contrib, o_ref, acc_ref, *, blocks_per_core,
                        block_rows, valid_rows, first_masked_block,
                        mask_possible):
    """Accumulate per-block contributions and write the per-core partial sum.

    contrib: (block_rows, C) f32 contributions of the current block.
    acc_ref: (8, C) f32 VMEM accumulator (used when block_rows % 8 == 0).
    o_ref:   (8, 128) f32 per-core output block (resident across the j axis).
    """
    core = pl.program_id(0)
    j = pl.program_id(1)
    lin = core * blocks_per_core + j
    ncols = contrib.shape[-1]

    def masked(x):
        row0 = lin * block_rows
        rows = row0 + jax.lax.broadcasted_iota(jnp.int32, (block_rows, 1), 0)
        return jnp.where(rows < valid_rows, x, 0.0)

    if block_rows % 8 == 0:
        # Lane/sublane-dense vector accumulation: pure VPU adds per step,
        # single XLU reduce per core at the end.
        @pl.when(j == 0)
        def _init():
            acc_ref[...] = jnp.zeros_like(acc_ref)

        def add(x):
            acc_ref[...] += x.reshape(block_rows // 8, 8, ncols).sum(axis=0)

        if mask_possible:
            # Interior blocks skip the mask entirely (pl.when gating).
            @pl.when(lin < first_masked_block)
            def _fast():
                add(contrib)

            @pl.when(lin >= first_masked_block)
            def _boundary():
                add(masked(contrib))
        else:
            add(contrib)

        @pl.when(j == pl.num_programs(1) - 1)
        def _finalize():
            o_ref[...] = jnp.zeros_like(o_ref) + jnp.sum(acc_ref[...])
    else:
        # Fallback (block_rows == batch, not a multiple of 8): single block
        # per core, accumulate the scalar directly into the output block.
        @pl.when(j == 0)
        def _init():
            o_ref[...] = jnp.zeros_like(o_ref)

        x = masked(contrib) if mask_possible else contrib
        o_ref[...] += jnp.sum(x)


# --------------------------------------------------------------------------
# Kernels.
# --------------------------------------------------------------------------
def _margin_loss_kernel(margin_ref, p_ref, n_ref, o_ref, acc_ref, **kw):
    margin = margin_ref[0]
    p = p_ref[...].astype(jnp.float32)                 # (TB, 1)
    n = n_ref[...].astype(jnp.float32)                 # (TB, N)
    clipped = jnp.maximum(p - n, -margin)              # (TB, N)
    _accum_and_finalize(clipped, o_ref, acc_ref, **kw)


def _margin_loss_adv_kernel(margin_ref, neg_temp_ref, p_ref, n_ref, o_ref,
                            acc_ref, *, exp_dtype, **kw):
    margin = margin_ref[0]
    neg_temp = neg_temp_ref[0]                         # == -adv_temperature
    p = p_ref[...].astype(jnp.float32)                 # (TB, 1)
    n = n_ref[...].astype(jnp.float32)                 # (TB, N)

    # softmax(-n*T) folded into the row reduction (no materialized weights).
    logits = n * neg_temp                              # = -n * T (sign folded)
    lmax = jnp.max(logits, axis=-1, keepdims=True)
    e = jnp.exp((logits - lmax).astype(exp_dtype)).astype(jnp.float32)
    denom = jnp.sum(e, axis=-1, keepdims=True)         # (TB, 1)

    clipped = jnp.maximum(p - n, -margin)              # (TB, N)
    num = jnp.sum(e * clipped, axis=-1, keepdims=True) # (TB, 1)
    per_row = num / denom                              # exact divide (cheap)
    _accum_and_finalize(per_row, o_ref, acc_ref, **kw)


# --------------------------------------------------------------------------
# Host-side tiling / pallas_call wrapper.
# --------------------------------------------------------------------------
def _pick_block_rows(batch, n_neg, itemsize, requested, vmem_cap):
    """Rows per block: generation-aware n-block target, multiple of 8."""
    if requested is None:
        big_vmem = vmem_cap >= (96 << 20)
        target = (8 << 20) if big_vmem else (6 << 20)    # n-block DMA target
        budget = (40 << 20) if big_vmem else (28 << 20)  # 2x (n + padded p)
        tb = target // max(1, n_neg * itemsize)
        tb = min(tb, budget // max(1, 2 * (n_neg + _LANES) * itemsize))
        tb = max(8, min(32768, (tb // 8) * 8))
    else:
        tb = max(8, (int(requested) // 8) * 8)
    if tb >= batch:
        return batch            # single full-extent row block (always legal)
    return tb


def _partial_sums_pallas(p_score, n_score, scalars, kernel_fn, acc_cols, *,
                         block_rows=None):
    """Returns the (masked) sum of per-row contributions as an f32 scalar."""
    batch, n_neg = n_score.shape
    itemsize = max(p_score.dtype.itemsize, n_score.dtype.itemsize)
    vmem_cap = _vmem_capacity_bytes()

    tb = _pick_block_rows(batch, n_neg, itemsize, block_rows, vmem_cap)
    n_blocks = _cdiv(batch, tb)
    num_cores = _num_tensorcores()                  # 2 only on v7x
    cores = num_cores if n_blocks >= num_cores else 1
    blocks_per_core = _cdiv(n_blocks, cores)
    last_block = n_blocks - 1

    # Blocks at/after this linear index may contain invalid rows (partial
    # last block and clamped overhang iterations) and must be masked.
    first_masked_block = n_blocks - 1 if (batch % tb) else n_blocks
    mask_possible = first_masked_block < cores * blocks_per_core

    def in_map(core, j, *_):
        # Clamp overhang iterations onto the last real block; their rows are
        # fully masked inside the kernel, so the duplicated data is harmless.
        blk = jnp.minimum(core * blocks_per_core + j, last_block)
        return (blk, 0)

    def out_map(core, j, *_):
        return (0, core)

    kern = functools.partial(kernel_fn,
                             blocks_per_core=blocks_per_core,
                             block_rows=tb,
                             valid_rows=batch,
                             first_masked_block=first_masked_block,
                             mask_possible=mask_possible)

    grid_spec = pltpu.PrefetchScalarGridSpec(
        num_scalar_prefetch=len(scalars),
        grid=(cores, blocks_per_core),
        in_specs=[
            pl.BlockSpec((tb, 1), in_map),       # p_score block
            pl.BlockSpec((tb, n_neg), in_map),   # n_score block
        ],
        out_specs=pl.BlockSpec((_PARTIAL_ROWS, _LANES), out_map),
        scratch_shapes=[pltpu.VMEM((8, acc_cols), jnp.float32)],
    )

    # VMEM: 2 buffers x (n block + lane-padded p block) + output + headroom.
    blk_bytes = tb * (n_neg + _LANES) * itemsize
    cap = (56 << 20) if vmem_cap >= (96 << 20) else (48 << 20)
    vmem_limit = int(min(max(2 * blk_bytes + (8 << 20), 16 << 20), cap))

    is_adv = len(scalars) == 2
    cost = pl.CostEstimate(
        flops=(8 if is_adv else 3) * batch * n_neg,
        transcendentals=(batch * n_neg if is_adv else 0),
        bytes_accessed=(batch * n_neg + batch) * itemsize
                        + cores * _PARTIAL_ROWS * _LANES * 4,
    )

    out = pl.pallas_call(
        kern,
        out_shape=jax.ShapeDtypeStruct((_PARTIAL_ROWS, cores * _LANES),
                                       jnp.float32),
        grid_spec=grid_spec,
        compiler_params=pltpu.CompilerParams(
            dimension_semantics=("parallel", "arbitrary"),
            vmem_limit_bytes=vmem_limit),
        cost_estimate=cost,
    )(*scalars, p_score, n_score)

    # Every element of core c's (8,128) slab holds that core's partial sum.
    partials = out[0].reshape(cores, _LANES)[:, 0]
    return jnp.sum(partials)


class MarginLoss:
    """JAX/Pallas re-implementation of the PyTorch MarginLoss forward pass."""

    def __init__(self, adv_temperature=None, margin=6.0):
        # Non-trainable "parameters", like the original nn.Parameter buffers.
        self.margin = jnp.asarray([margin], dtype=jnp.float32)
        if adv_temperature is not None:
            self.adv_temperature = jnp.asarray([adv_temperature],
                                               dtype=jnp.float32)
            # Sign folded into the prefetched scalar: kernel uses n * (-T).
            self.neg_adv_temperature = jnp.asarray([-adv_temperature],
                                                   dtype=jnp.float32)
            self.adv_flag = True
        else:
            self.adv_flag = False

    @functools.partial(jax.jit, static_argnums=(0,),
                       static_argnames=("block_rows",))
    def __call__(self, p_score, n_score, block_rows=None):
        if p_score.ndim == 1:
            p_score = p_score[:, None]
        batch, n_neg = n_score.shape

        if self.adv_flag:
            # bf16 exp only when the streamed inputs are sub-32-bit and the
            # generation has a bf16 EUP (v6e/v7x); v5e keeps f32 exp.
            use_bf16_exp = (jnp.dtype(n_score.dtype).itemsize <= 2
                            and _supports_bf16_eup())
            exp_dtype = jnp.bfloat16 if use_bf16_exp else jnp.float32
            kern = functools.partial(_margin_loss_adv_kernel,
                                     exp_dtype=exp_dtype)
            total = _partial_sums_pallas(
                p_score, n_score, (self.margin, self.neg_adv_temperature),
                kern, acc_cols=1, block_rows=block_rows)
            return total / jnp.float32(batch) + self.margin
        else:
            total = _partial_sums_pallas(
                p_score, n_score, (self.margin,),
                _margin_loss_kernel, acc_cols=n_neg, block_rows=block_rows)
            return total / jnp.float32(batch * n_neg) + self.margin

    def predict(self, p_score, n_score):
        import numpy as np
        return np.asarray(self(p_score, n_score))


def _reference(p, n, margin, adv_temperature=None):
    p = p.astype(jnp.float32)
    n = n.astype(jnp.float32)
    clipped = jnp.maximum(p - n, -margin)
    if adv_temperature is not None:
        w = jax.nn.softmax(-n * adv_temperature, axis=-1)
        return (w * clipped).sum(axis=-1).mean() + margin
    return clipped.mean() + margin


if __name__ == "__main__":
    key = jax.random.PRNGKey(0)
    kp, kn = jax.random.split(key)

    # B=20 with block_rows=8 exercises: multi-block vector accumulation, the
    # pl.when-gated mask on the partial last block, the clamped overhang
    # block, and the v7x-only 2-way "parallel" core split.
    B, N = 20, 128
    p_score = jax.random.normal(kp, (B, 1), dtype=jnp.float32)
    n_score = jax.random.normal(kn, (B, N), dtype=jnp.float32)

    # Non-adversarial variant, explicit small blocks.
    loss_mod = MarginLoss(adv_temperature=None, margin=6.0)
    out = jax.block_until_ready(loss_mod(p_score, n_score, block_rows=8))
    ref = _reference(p_score, n_score, 6.0)
    assert out.shape == (1,)
    assert jnp.allclose(out[0], ref, atol=1e-5, rtol=1e-5), (out, ref)

    # Non-adversarial, auto block sizing -> single full-extent block fallback.
    out_auto = jax.block_until_ready(loss_mod(p_score, n_score))
    assert jnp.allclose(out_auto[0], ref, atol=1e-5, rtol=1e-5), (out_auto, ref)

    # Batch divisible by the block: exercises the unmasked (no pl.when) path.
    B2 = 32
    kp2, kn2 = jax.random.split(jax.random.PRNGKey(0), 2)
    p2 = jax.random.normal(kp2, (B2, 1), dtype=jnp.float32)
    n2 = jax.random.normal(kn2, (B2, N), dtype=jnp.float32)
    out2 = jax.block_until_ready(loss_mod(p2, n2, block_rows=8))
    ref2 = _reference(p2, n2, 6.0)
    assert jnp.allclose(out2[0], ref2, atol=1e-5, rtol=1e-5), (out2, ref2)

    # Adversarial (self-adversarial negative sampling) variant, f32 inputs:
    # exact division + f32 exp -> tight tolerance.
    loss_adv = MarginLoss(adv_temperature=1.5, margin=6.0)
    out_adv = jax.block_until_ready(loss_adv(p_score, n_score, block_rows=8))
    ref_adv = _reference(p_score, n_score, 6.0, adv_temperature=1.5)
    assert out_adv.shape == (1,)
    assert jnp.allclose(out_adv[0], ref_adv, atol=1e-3, rtol=1e-3), (out_adv, ref_adv)

    # bf16 inputs stay bf16 on the wire; exp may run in bf16 on v6e/v7x.
    p_bf = p_score.astype(jnp.bfloat16)
    n_bf = n_score.astype(jnp.bfloat16)
    out_bf = jax.block_until_ready(loss_adv(p_bf, n_bf, block_rows=None))
    ref_bf = _reference(p_bf, n_bf, 6.0, adv_temperature=1.5)
    assert out_bf.shape == (1,)
    assert jnp.allclose(out_bf[0], ref_bf, atol=5e-2, rtol=5e-2), (out_bf, ref_bf)

    print("KERNEL_OK")
</pallas_src>

<mosaic_0001>
module attributes {stable_mosaic.version = 11 : i64} {
  func.func @_margin_loss_kernel(%arg0: i32, %arg1: i32, %arg2: memref<1xf32, #tpu.memory_space<smem>>, %arg3: memref<8x1xf32, #tpu.memory_space<vmem>>, %arg4: memref<8x128xf32, #tpu.memory_space<vmem>>, %arg5: memref<8x128xf32, #tpu.memory_space<vmem>>, %arg6: memref<8x128xf32, #tpu.memory_space<vmem>>) attributes {dimension_semantics = [#tpu.dimension_semantics<parallel>, #tpu.dimension_semantics<arbitrary>], iteration_bounds = array<i64: 1, 3>, scalar_prefetch = 1 : i64, scratch_operands = 1 : i64, tpu.core_type = #tpu.core_type<tc>, window_params = [{transform_indices = @transform_0, window_bounds = array<i64: 8, 1>}, {transform_indices = @transform_1, window_bounds = array<i64: 8, 128>}, {transform_indices = @transform_2, window_bounds = array<i64: 8, 128>}]} {
    %c0 = arith.constant 0 : index
    %0 = memref.load %arg2[%c0] : memref<1xf32, #tpu.memory_space<smem>>
    %c0_0 = arith.constant 0 : index
    %c0_1 = arith.constant 0 : index
    %1 = vector.load %arg3[%c0_0, %c0_1] : memref<8x1xf32, #tpu.memory_space<vmem>>, vector<8x1xf32>
    %c0_2 = arith.constant 0 : index
    %c0_3 = arith.constant 0 : index
    %2 = vector.load %arg4[%c0_2, %c0_3] : memref<8x128xf32, #tpu.memory_space<vmem>>, vector<8x128xf32>
    %3 = vector.broadcast %1 : vector<8x1xf32> to vector<8x128xf32>
    %4 = arith.subf %3, %2 : vector<8x128xf32>
    %cst = arith.constant 0.000000e+00 : f32
    %5 = arith.subf %cst, %0 : f32
    %6 = vector.broadcast %5 : f32 to vector<8x128xf32>
    %7 = arith.maximumf %4, %6 : vector<8x128xf32>
    %c3_i32 = arith.constant 3 : i32
    %8 = arith.muli %arg0, %c3_i32 : i32
    %9 = arith.addi %8, %arg1 : i32
    %c0_i32 = arith.constant 0 : i32
    %10 = arith.cmpi eq, %arg1, %c0_i32 : i32
    %11 = arith.extui %10 : i1 to i32
    %c0_i32_4 = arith.constant 0 : i32
    %12 = arith.cmpi ne, %11, %c0_i32_4 : i32
    scf.if %12 {
      %cst_10 = arith.constant 0.000000e+00 : f32
      %22 = vector.broadcast %cst_10 : f32 to vector<8x128xf32>
      %c0_11 = arith.constant 0 : index
      %c0_12 = arith.constant 0 : index
      %23 = vector.load %arg6[%c0_11, %c0_12] : memref<8x128xf32, #tpu.memory_space<vmem>>, vector<8x128xf32>
      tpu.vector_store %arg6[%c0_11, %c0_12], %22 {strides = array<i32>} : memref<8x128xf32, #tpu.memory_space<vmem>>, vector<8x128xf32>,
    } else {
    }
    %c2_i32 = arith.constant 2 : i32
    %13 = arith.cmpi slt, %9, %c2_i32 : i32
    %14 = arith.extui %13 : i1 to i32
    %c0_i32_5 = arith.constant 0 : i32
    %15 = arith.cmpi ne, %14, %c0_i32_5 : i32
    scf.if %15 {
      %c0_10 = arith.constant 0 : index
      %c0_11 = arith.constant 0 : index
      %22 = vector.load %arg6[%c0_10, %c0_11] : memref<8x128xf32, #tpu.memory_space<vmem>>, vector<8x128xf32>
      %23 = vector.shape_cast %7 : vector<8x128xf32> to vector<1x8x128xf32>
      %cst_12 = arith.constant dense<0.000000e+00> : vector<8x128xf32>
      %24 = vector.multi_reduction <add>, %23, %cst_12 [0] : vector<1x8x128xf32> to vector<8x128xf32>
      %25 = arith.addf %22, %24 : vector<8x128xf32>
      %c0_13 = arith.constant 0 : index
      %c0_14 = arith.constant 0 : index
      %26 = vector.load %arg6[%c0_13, %c0_14] : memref<8x128xf32, #tpu.memory_space<vmem>>, vector<8x128xf32>
      tpu.vector_store %arg6[%c0_13, %c0_14], %25 {strides = array<i32>} : memref<8x128xf32, #tpu.memory_space<vmem>>, vector<8x128xf32>,
    } else {
    }
    %c2_i32_6 = arith.constant 2 : i32
    %16 = arith.cmpi sge, %9, %c2_i32_6 : i32
    %17 = arith.extui %16 : i1 to i32
    %c0_i32_7 = arith.constant 0 : i32
    %18 = arith.cmpi ne, %17, %c0_i32_7 : i32
    scf.if %18 {
      %c8_i32 = arith.constant 8 : i32
      %22 = arith.muli %9, %c8_i32 : i32
      %23 = tpu.iota {dimensions = array<i32: 0>} : vector<8x1xi32>
      %24 = vector.broadcast %22 : i32 to vector<8x1xi32>
      %25 = arith.addi %24, %23 : vector<8x1xi32>
      %c20_i32 = arith.constant 20 : i32
      %26 = vector.broadcast %c20_i32 : i32 to vector<8x1xi32>
      %27 = arith.cmpi slt, %25, %26 : vector<8x1xi32>
      %cst_10 = arith.constant 0.000000e+00 : f32
      %28 = vector.shape_cast %27 : vector<8x1xi1> to vector<8x1xi1>
      %29 = vector.broadcast %28 : vector<8x1xi1> to vector<8x128xi1>
      %30 = vector.broadcast %cst_10 : f32 to vector<8x128xf32>
      %31 = arith.select %29, %7, %30 : vector<8x128xi1>, vector<8x128xf32>
      %c0_11 = arith.constant 0 : index
      %c0_12 = arith.constant 0 : index
      %32 = vector.load %arg6[%c0_11, %c0_12] : memref<8x128xf32, #tpu.memory_space<vmem>>, vector<8x128xf32>
      %33 = vector.shape_cast %31 : vector<8x128xf32> to vector<1x8x128xf32>
      %cst_13 = arith.constant dense<0.000000e+00> : vector<8x128xf32>
      %34 = vector.multi_reduction <add>, %33, %cst_13 [0] : vector<1x8x128xf32> to vector<8x128xf32>
      %35 = arith.addf %32, %34 : vector<8x128xf32>
      %c0_14 = arith.constant 0 : index
      %c0_15 = arith.constant 0 : index
      %36 = vector.load %arg6[%c0_14, %c0_15] : memref<8x128xf32, #tpu.memory_space<vmem>>, vector<8x128xf32>
      tpu.vector_store %arg6[%c0_14, %c0_15], %35 {strides = array<i32>} : memref<8x128xf32, #tpu.memory_space<vmem>>, vector<8x128xf32>,
    } else {
    }
    %c2_i32_8 = arith.constant 2 : i32
    %19 = arith.cmpi eq, %arg1, %c2_i32_8 : i32
    %20 = arith.extui %19 : i1 to i32
    %c0_i32_9 = arith.constant 0 : i32
    %21 = arith.cmpi ne, %20, %c0_i32_9 : i32
    scf.if %21 {
      %cst_10 = arith.constant 0.000000e+00 : f32
      %22 = vector.broadcast %cst_10 : f32 to vector<8x128xf32>
      %c0_11 = arith.constant 0 : index
      %c0_12 = arith.constant 0 : index
      %23 = vector.load %arg6[%c0_11, %c0_12] : memref<8x128xf32, #tpu.memory_space<vmem>>, vector<8x128xf32>
      %24 = vector.shape_cast %23 : vector<8x128xf32> to vector<1x8x128xf32>
      %cst_13 = arith.constant dense<0.000000e+00> : vector<1xf32>
      %25 = vector.multi_reduction <add>, %24, %cst_13 [1, 2] : vector<1x8x128xf32> to vector<1xf32>
      %26 = vector.shape_cast %25 : vector<1xf32> to vector<1x1x1xf32>
      %27 = vector.extract %26[0, 0, 0] : f32 from vector<1x1x1xf32>
      %28 = vector.broadcast %27 : f32 to vector<8x128xf32>
      %29 = arith.addf %22, %28 : vector<8x128xf32>
      %c0_14 = arith.constant 0 : index
      %c0_15 = arith.constant 0 : index
      %30 = vector.load %arg5[%c0_14, %c0_15] : memref<8x128xf32, #tpu.memory_space<vmem>>, vector<8x128xf32>
      tpu.vector_store %arg5[%c0_14, %c0_15], %29 {strides = array<i32>} : memref<8x128xf32, #tpu.memory_space<vmem>>, vector<8x128xf32>,
    } else {
    }
    return
  }
  func.func @transform_0(%arg0: i32, %arg1: i32, %arg2: memref<1xf32, #tpu.memory_space<smem>>) -> (i32, i32) {
    %c3_i32 = arith.constant 3 : i32
    %0 = arith.muli %arg0, %c3_i32 : i32
    %1 = arith.addi %0, %arg1 : i32
    %c2_i32 = arith.constant 2 : i32
    %2 = arith.minsi %1, %c2_i32 : i32
    %c0_i32 = arith.constant 0 : i32
    %c0_i32_0 = arith.constant 0 : i32
    return %2, %c0_i32 : i32, i32
  }
  func.func @transform_1(%arg0: i32, %arg1: i32, %arg2: memref<1xf32, #tpu.memory_space<smem>>) -> (i32, i32) {
    %c3_i32 = arith.constant 3 : i32
    %0 = arith.muli %arg0, %c3_i32 : i32
    %1 = arith.addi %0, %arg1 : i32
    %c2_i32 = arith.constant 2 : i32
    %2 = arith.minsi %1, %c2_i32 : i32
    %c0_i32 = arith.constant 0 : i32
    %c0_i32_0 = arith.constant 0 : i32
    return %2, %c0_i32 : i32, i32
  }
  func.func @transform_2(%arg0: i32, %arg1: i32, %arg2: memref<1xf32, #tpu.memory_space<smem>>) -> (i32, i32) {
    %c0_i32 = arith.constant 0 : i32
    %c0_i32_0 = arith.constant 0 : i32
    return %c0_i32, %arg0 : i32, i32
  }
}

</mosaic_0001>

<llo_original>
// kernel: a_call__.1
$region0: #{a_call__.1}
  #allocation0 [shape = 'u32[]', space=smem, size = 0x4, offset = 0x4, fixed_abs, tag = 'smem constant byte address 0x4 - core index']
  #allocation1 [shape = 'u32[144,128]{1,0:T(1,128)}', space=vmem, size = 0x12000, scoped, tag = 'internal scratch']
  #allocation2 [shape = 'f32[8,128]{1,0:T(8,128)}', space=vmem, size = 0x1000, scoped, tag = 'scratch operand']
  #allocation3 [shape = 's32[1]{0}', space=sflag, size = 0x4, scoped, tag = 'scoped memory for a_call__.1']
  #allocation4 [shape = 'f32[1]{0:T(128)S(6)}', space=smem, size = 0x200, scoped, tag = 'prefetched SMEM operand 0']
  %s0 = inlined_call_operand.<no memory space> [shape: f32[1], index: 0, kind: input, shape index: {}]
  %s1 = inlined_call_operand.vmem [shape: f32[20,1], index: 1, kind: input, shape index: {}]
  %s2 = inlined_call_operand.vmem [shape: f32[20,128], index: 2, kind: input, shape index: {}]
  %s3 = inlined_call_operand.vmem [shape: f32[8,128], index: 3, kind: output, shape index: {}]
  %s4 = sld [smem:[#allocation0]]
  $region57: #{a_call__.1} parent=0
    _
  %s6 = ssub.s32 1, %s4
  %s7 = scalar_select 0, %s6, %s4
  %8 = sst [smem:[#allocation4]] %s0
  loop: start=0, step=1, limit=5
  $region2: #{a_call__.1} parent=0 // loop_pre_header
    _
  $region3: #{a_call__.1} parent=0 // loop_header
    %s10 = sphi 0, %s14
    %p11 = scmp.ge.s32.totalorder %s10, 5
    %s17 = sphi 0, %s29
    %s18 = sphi 0, %s25
    %s19 = sphi 0, %s17
    %s20 = sphi 0, %s18
    %s21 = sphi 0, %s19
    %s22 = sphi 0, %s20
    %s40 = sphi 0, %s42
    %s43 = sphi 0, %s40
    %s44 = sphi 0, %s43
    %s60 = sphi 0, %s44
    %s74 = sphi 0, %s76
    %s77 = sphi 0, %s74
    %s78 = sphi 0, %s77
    %s94 = sphi 0, %s78
    %s100 = sphi 0, %s102
    %s103 = sphi 0, %s100
    %s104 = sphi 0, %s103
    %s120 = sphi 0, %s104
  $region4: #{a_call__.1} parent=0 // loop_header_branch
    %13 = sbr.rel (%p11) target = $region8
  $region5: #{a_call__.1} parent=0 // loop_body
    %s15 = ssub.s32 %s10, 1
    %s16 = ssub.s32 %s10, 2
    %s23 = sadd.s32 1, %s18
    %p24 = scmp.ge.s32.totalorder %s23, 3
    %s25 = scalar_select %p24, 0, %s23
    %s26 = sadd.s32 1, %s17
    %s27 = scalar_select %p24, %s26, %s17
    %p28 = scmp.ge.s32.totalorder %s27, 1
    %s29 = scalar_select %p28, 0, %s27
    %s30 = smul.u32 %s17, 3
    %s31 = sadd.s32 %s30, %s18
    %p32 = scmp.lt.s32.totalorder %s31, 2
    %s33 = scalar_select %p32, %s31, 2
    %s34 = smul.u32 %s29, 3
    %s35 = sadd.s32 %s34, %s25
    %p36 = scmp.lt.s32.totalorder %s35, 2
    %s37 = scalar_select %p36, %s35, 2
    %s38 = ssub.s32 %s33, %s37
    %p39 = scmp.eq.s32.totalorder %s38, 0
    %s41 = sadd.s32 %s40, 1
    %s42 = scalar_select %p39, %s40, %s41
    %p45 = pneg %p39
    %p46 = scmp.eq.s32.totalorder %s10, 2
    %p47 = por %p45, %p46
    %p48 = scmp.ne.s32.totalorder %s40, %s43
    %p49 = scmp.eq.s32.totalorder %s10, 0
    %p50 = por %p48, %p49
    %p51 = scmp.ne.s32.totalorder %s40, %s43
    %p52 = scmp.eq.s32.totalorder %s15, 2
    %p53 = por %p51, %p52
    %p54 = scmp.ne.s32.totalorder %s43, %s44
    %p55 = scmp.eq.s32.totalorder %s15, 0
    %p56 = por %p54, %p55
    %p57 = scmp.ne.s32.totalorder %s43, %s44
    %p58 = scmp.eq.s32.totalorder %s16, 2
    %p59 = por %p57, %p58
    %p61 = scmp.ne.s32.totalorder %s44, %s60
    %p62 = scmp.eq.s32.totalorder %s16, 0
    %p63 = por %p61, %p62
    %s64 = smul.u32 %s17, 3
    %s65 = sadd.s32 %s64, %s18
    %p66 = scmp.lt.s32.totalorder %s65, 2
    %s67 = scalar_select %p66, %s65, 2
    %s68 = smul.u32 %s29, 3
    %s69 = sadd.s32 %s68, %s25
    %p70 = scmp.lt.s32.totalorder %s69, 2
    %s71 = scalar_select %p70, %s69, 2
    %s72 = ssub.s32 %s67, %s71
    %p73 = scmp.eq.s32.totalorder %s72, 0
    %s75 = sadd.s32 %s74, 1
    %s76 = scalar_select %p73, %s74, %s75
    %p79 = pneg %p73
    %p80 = scmp.eq.s32.totalorder %s10, 2
    %p81 = por %p79, %p80
    %p82 = scmp.ne.s32.totalorder %s74, %s77
    %p83 = scmp.eq.s32.totalorder %s10, 0
    %p84 = por %p82, %p83
    %p85 = scmp.ne.s32.totalorder %s74, %s77
    %p86 = scmp.eq.s32.totalorder %s15, 2
    %p87 = por %p85, %p86
    %p88 = scmp.ne.s32.totalorder %s77, %s78
    %p89 = scmp.eq.s32.totalorder %s15, 0
    %p90 = por %p88, %p89
    %p91 = scmp.ne.s32.totalorder %s77, %s78
    %p92 = scmp.eq.s32.totalorder %s16, 2
    %p93 = por %p91, %p92
    %p95 = scmp.ne.s32.totalorder %s78, %s94
    %p96 = scmp.eq.s32.totalorder %s16, 0
    %p97 = por %p95, %p96
    %s98 = ssub.s32 %s17, %s29
    %p99 = scmp.eq.s32.totalorder %s98, 0
    %s101 = sadd.s32 %s100, 1
    %s102 = scalar_select %p99, %s100, %s101
    %p105 = pneg %p99
    %p106 = scmp.eq.s32.totalorder %s10, 2
    %p107 = por %p105, %p106
    %p108 = scmp.ne.s32.totalorder %s100, %s103
    %p109 = scmp.eq.s32.totalorder %s10, 0
    %p110 = por %p108, %p109
    %p111 = scmp.ne.s32.totalorder %s100, %s103
    %p112 = scmp.eq.s32.totalorder %s15, 2
    %p113 = por %p111, %p112
    %p114 = scmp.ne.s32.totalorder %s103, %s104
    %p115 = scmp.eq.s32.totalorder %s15, 0
    %p116 = por %p114, %p115
    %p117 = scmp.ne.s32.totalorder %s103, %s104
    %p118 = scmp.eq.s32.totalorder %s16, 2
    %p119 = por %p117, %p118
    %p121 = scmp.ne.s32.totalorder %s104, %s120
    %p122 = scmp.eq.s32.totalorder %s16, 0
    %p123 = por %p121, %p122
    %p124 = scmp.le.s32.totalorder 1, %s10
    %p125 = scmp.lt.s32.totalorder %s10, 4
    %p126 = pnand %p124, %p125
    %p127 = pneg %p126
    // Predicated region
    $region9: #{a_call__.1} parent=5 // pred_check
      _
    $region10: #{a_call__.1} parent=5 // pred_check_branch
      %129 = sbr.rel (%p126) target = $region12
    $region11: #{a_call__.1} parent=5 // pred_region
      %s130 = ssub.s32 %s10, 1
    $region12: #{a_call__.1} parent=5 // pred_fallthru
      _
    %p131 = scmp.lt.s32.totalorder %s10, 3
    // Predicated region
    $region13: #{a_call__.1} parent=5 // pred_check
      %p132 = pneg %p131
    $region14: #{a_call__.1} parent=5 // pred_check_branch
      %134 = sbr.rel (%p132) target = $region16
    $region15: #{a_call__.1} parent=5 // pred_region
      // Predicated region
      $region17: #{a_call__.1} parent=15 // pred_check
        %p135 = pneg %p50
      $region18: #{a_call__.1} parent=15 // pred_check_branch
        %137 = sbr.rel (%p135) target = $region20
      $region19: #{a_call__.1} parent=15 // pred_region
        %s138 = smul.u32 %s17, 3
        %s139 = sadd.s32 %s138, %s18
        %p140 = scmp.lt.s32.totalorder %s139, 2
        %s141 = scalar_select %p140, %s139, 2
        %p142 = scmp.lt.s32.totalorder %s141, 2
        %s143 = scalar_select %p142, %s141, 2
        %s144 = smul.addr %s143, 8
        %s145 = scalar_lea.vmem %s1, %s144
        %s146 = smul.u32 %s17, 3
        %s147 = sadd.s32 %s146, %s18
        %p148 = scmp.lt.s32.totalorder %s147, 2
        %s149 = scalar_select %p148, %s147, 2
      $region20: #{a_call__.1} parent=15 // pred_fallthru
        _
      // Predicated region
      $region21: #{a_call__.1} parent=15 // pred_check
        %p150 = pneg %p84
      $region22: #{a_call__.1} parent=15 // pred_check_branch
        %152 = sbr.rel (%p150) target = $region24
      $region23: #{a_call__.1} parent=15 // pred_region
        %s153 = smul.u32 %s17, 3
        %s154 = sadd.s32 %s153, %s18
        %p155 = scmp.lt.s32.totalorder %s154, 2
        %s156 = scalar_select %p155, %s154, 2
        %p157 = scmp.lt.s32.totalorder %s156, 2
        %s158 = scalar_select %p157, %s156, 2
        %s159 = smul.addr %s158, 8
        %s160 = scalar_lea.vmem %s2, %s159
        %s161 = smul.u32 %s17, 3
        %s162 = sadd.s32 %s161, %s18
        %p163 = scmp.lt.s32.totalorder %s162, 2
        %s164 = scalar_select %p163, %s162, 2
      $region24: #{a_call__.1} parent=15 // pred_fallthru
        _
    $region16: #{a_call__.1} parent=5 // pred_fallthru
      _
    %p165 = scmp.le.s32.totalorder 1, %s10
    %p166 = scmp.lt.s32.totalorder %s10, 4
    %p167 = pnand %p165, %p166
    %p168 = pneg %p167
    // Predicated region
    $region25: #{a_call__.1} parent=5 // pred_check
      _
    $region26: #{a_call__.1} parent=5 // pred_check_branch
      %170 = sbr.rel (%p167) target = $region28
    $region27: #{a_call__.1} parent=5 // pred_region
      %s171 = ssub.s32 %s10, 1
      %s172 = smul.u32 %s19, 3
      %s173 = sadd.s32 %s172, %s20
      %p174 = scmp.lt.s32.totalorder %s173, 2
      %s175 = scalar_select %p174, %s173, 2
      %p176 = scmp.lt.s32.totalorder %s175, 2
      %s177 = scalar_select %p176, %s175, 2
      %s178 = smul.addr %s177, 8
      %s179 = scalar_lea.vmem %s1, %s178
      %p180 = pneg %p56
      %p181 = pneg %p53
      %s182 = smul.u32 %s19, 3
      %s183 = sadd.s32 %s182, %s20
      %p184 = scmp.lt.s32.totalorder %s183, 2
      %s185 = scalar_select %p184, %s183, 2
      %p186 = scmp.lt.s32.totalorder %s185, 2
      %s187 = scalar_select %p186, %s185, 2
      %s188 = smul.addr %s187, 8
      %s189 = scalar_lea.vmem %s2, %s188
      %p190 = pneg %p90
      %p191 = pneg %p87
      %p192 = pneg %p116
      %p193 = pneg %p113
      %p194 = scmp.lt.s32.totalorder %s19, 0
      %s195 = scalar_select %p194, %s19, 0
      %s196 = smul.addr %s195, 8
      %s197 = scalar_lea.vmem %s3, %s196
      %s198 = smul.u32 %s19, 3
      %s199 = sadd.s32 %s198, %s20
      %p200 = scmp.lt.s32.totalorder %s199, 2
      %s201 = scalar_select %p200, %s199, 2
      %p202 = scmp.lt.s32.totalorder %s201, 2
      %s203 = scalar_select %p202, %s201, 2
      %s204 = smul.addr %s203, 8
      %s205 = scalar_lea.vmem %s1, %s204
      %s206 = smul.u32 %s19, 3
      %s207 = sadd.s32 %s206, %s20
      %p208 = scmp.lt.s32.totalorder %s207, 2
      %s209 = scalar_select %p208, %s207, 2
      %s210 = smul.u32 %s19, 3
      %s211 = sadd.s32 %s210, %s20
      %p212 = scmp.lt.s32.totalorder %s211, 2
      %s213 = scalar_select %p212, %s211, 2
      %p214 = scmp.lt.s32.totalorder %s213, 2
      %s215 = scalar_select %p214, %s213, 2
      %s216 = smul.addr %s215, 8
      %s217 = scalar_lea.vmem %s2, %s216
      %s218 = smul.u32 %s19, 3
      %s219 = sadd.s32 %s218, %s20
      %p220 = scmp.lt.s32.totalorder %s219, 2
      %s221 = scalar_select %p220, %s219, 2
      %p222 = scmp.lt.s32.totalorder %s19, 0
      %s223 = scalar_select %p222, %s19, 0
      %s224 = smul.addr %s223, 8
      %s225 = scalar_lea.vmem %s3, %s224
      %s226 = sld [smem:[#allocation4]]
      %v227 = vld [vmem:[%s205] sm:$0xff]
      %v228 = vld [vmem:[%s217] sm:$0xff]
      %230 = vset.pattern.permute.xlu0 0
      %231 = vperm.xlu0 %230, %v227
      %v232 = vpop.permute.xlu0 %231
      %v234 = vsub.f32 %v232, %v228
      %s235 = ssub.f32 0.0, %s226
      %v236 = vstv %s235
      %v237 = vmax.f32 %v234, %v236
      %s238 = smul.u32 %s19, 3
      %s239 = sadd.s32 %s238, %s20
      %p240 = scmp.eq.s32.totalorder %s20, 0
      // Predicated region
      $region29: #{a_call__.1} parent=27 // pred_check
        %p241 = pneg %p240
      $region30: #{a_call__.1} parent=27 // pred_check_branch
        %243 = sbr.rel (%p241) target = $region32
      $region31: #{a_call__.1} parent=27 // pred_region
        %244 = vst [vmem:[#allocation2] sm:$0xff] 0.0
      $region32: #{a_call__.1} parent=27 // pred_fallthru
        _
      %p245 = scmp.lt.s32.totalorder %s239, 2
      // Predicated region
      $region33: #{a_call__.1} parent=27 // pred_check
        %p246 = pneg %p245
      $region34: #{a_call__.1} parent=27 // pred_check_branch
        %248 = sbr.rel (%p246) target = $region36
      $region35: #{a_call__.1} parent=27 // pred_region
        %v249 = vld [vmem:[#allocation2] sm:$0xff]
        %v250 = vadd.f32 %v237, 0.0
        %v251 = vadd.f32 %v249, %v250
        %252 = vst [vmem:[#allocation2] sm:$0xff] %v251
      $region36: #{a_call__.1} parent=27 // pred_fallthru
        _
      %p253 = scmp.ge.s32.totalorder %s239, 2
      // Predicated region
      $region37: #{a_call__.1} parent=27 // pred_check
        %p254 = pneg %p253
      $region38: #{a_call__.1} parent=27 // pred_check_branch
        %256 = sbr.rel (%p254) target = $region40
      $region39: #{a_call__.1} parent=27 // pred_region
        %s257 = smul.u32 %s239, 8
        %v258 = vlaneseq
        %v259 = vshrl.u32 %v258, 7
        %v260 = vstv %s257
        %v261 = vadd.s32 %v260, %v259
        %vm262 = vcmp.lt.s32.totalorder %v261, 20
        %v263 = vsel %vm262, 1, 0
        %vm264 = vcmp.eq.s32.totalorder %v263, 1
        %v265 = vsel %vm264, %v237, 0.0
        %v266 = vld [vmem:[#allocation2] sm:$0xff]
        %v267 = vadd.f32 %v265, 0.0
        %v268 = vadd.f32 %v266, %v267
        %269 = vst [vmem:[#allocation2] sm:$0xff] %v268
      $region40: #{a_call__.1} parent=27 // pred_fallthru
        _
      %p270 = scmp.eq.s32.totalorder %s20, 2
      // Predicated region
      $region41: #{a_call__.1} parent=27 // pred_check
        %p271 = pneg %p270
      $region42: #{a_call__.1} parent=27 // pred_check_branch
        %273 = sbr.rel (%p271) target = $region44
      $region43: #{a_call__.1} parent=27 // pred_region
        %v274 = vld [vmem:[#allocation2] sm:$0xff]
        %275 = vadd.xlane.f32.xlu0 %v274
        %v276 = vpop.xlane.xlu0 %275
        %v277 = vrot.slane %v276, 4
        %v278 = vadd.f32 %v276, %v277
        %v279 = vrot.slane %v278, 2
        %v280 = vadd.f32 %v278, %v279
        %v281 = vrot.slane %v280, 1
        %v282 = vadd.f32 %v280, %v281
        %s283 = vtos %v282
        %v284 = vstv %s283
        %v285 = vadd.f32 %v284, 0.0
        %286 = vst [vmem:[%s225] sm:$0xff] %v285
      $region44: #{a_call__.1} parent=27 // pred_fallthru
        _
      %p287 = scmp.lt.s32.totalorder %s19, 0
      %s288 = scalar_select %p287, %s19, 0
      %s289 = smul.addr %s288, 8
      %s290 = scalar_lea.vmem %s3, %s289
      // Predicated region
      $region45: #{a_call__.1} parent=27 // pred_check
        %p291 = pneg %p113
      $region46: #{a_call__.1} parent=27 // pred_check_branch
        %293 = sbr.rel (%p291) target = $region48
      $region47: #{a_call__.1} parent=27 // pred_region
        _
      $region48: #{a_call__.1} parent=27 // pred_fallthru
        _
      // Predicated region
      $region49: #{a_call__.1} parent=27 // pred_check
        %p294 = pneg %p113
      $region50: #{a_call__.1} parent=27 // pred_check_branch
        %296 = sbr.rel (%p294) target = $region52
      $region51: #{a_call__.1} parent=27 // pred_region
        %p297 = scmp.lt.s32.totalorder %s19, 0
        %s298 = scalar_select %p297, %s19, 0
        %s299 = smul.addr %s298, 8
        %s300 = scalar_lea.vmem %s3, %s299
      $region52: #{a_call__.1} parent=27 // pred_fallthru
        _
    $region28: #{a_call__.1} parent=5 // pred_fallthru
      _
    %p301 = scmp.le.s32.totalorder 2, %s10
    // Predicated region
    $region53: #{a_call__.1} parent=5 // pred_check
      %p302 = pneg %p301
    $region54: #{a_call__.1} parent=5 // pred_check_branch
      %304 = sbr.rel (%p302) target = $region56
    $region55: #{a_call__.1} parent=5 // pred_region
      %s305 = ssub.s32 %s10, 2
    $region56: #{a_call__.1} parent=5 // pred_fallthru
      _
  $region6: #{a_call__.1} parent=0 // loop_footer
    %s14 = sadd.s32 1, %s10
  $region7: #{a_call__.1} parent=0 // loop_footer_branch
    %9 = sbr.rel target = $region3
  $region8: #{a_call__.1} parent=0 // loop_exit
    _

</llo_original>
